<compile_context>
chip_gen: v6e
topology: v6e:2x2x1
jax: 0.10.0
libtpu: 0.0.40
codegen_flags: <defaults>
</compile_context>

<pallas_src>
from functools import partial

import jax
import jax.numpy as jnp
from jax.experimental import pallas as pl
from jax.experimental.pallas import tpu as pltpu

LEAKY_SLOPE = 0.01
LN_EPS = 1e-5


def _round_up(v, m):
    return (v + m - 1) // m * m


def _vmem_cap_bytes():
    """Physical VMEM per TensorCore (generation-aware), conservative fallback."""
    try:
        info = pltpu.get_tpu_info()
        cap = getattr(info, "vmem_capacity_bytes", None)
        if cap:
            return int(cap)
    except Exception:
        pass
    return 64 << 20  # v7x per-core size; safe lower bound everywhere


def _disc_kernel(x_ref, w1_ref, w2_ref, wo_ref, b12_ref, bo_ref, out_ref, *,
                 d_model):
    """One batch tile: two (Linear -> LeakyReLU -> LayerNorm) blocks + out Linear.

    LayerNorm affines are pre-folded into w2/b2 and wo/bo by the wrapper, so the
    in-kernel LayerNorm is just the normalization over the *real* d_model.
    """
    x = x_ref[...]
    d_pad = x.shape[-1]
    n_extra = d_pad - d_model          # zero-padded feature columns (static)
    inv_d = 1.0 / d_model

    def block(h, w_ref, b_row):
        # Linear: MXU dot in the weight dtype (bf16/f32), f32 accumulation.
        hc = h.astype(w_ref.dtype)
        h = jnp.dot(hc, w_ref[...], preferred_element_type=jnp.float32) + b_row
        # LeakyReLU (slope < 1): max form, one fewer VALU op than where().
        h = jnp.maximum(h, LEAKY_SLOPE * h)
        # Padded feature columns of h are exactly zero (zero weights + zero
        # bias, LeakyReLU(0) = 0), so the sum over d_pad equals the sum over
        # the real d_model.
        mean = jnp.sum(h, axis=-1, keepdims=True) * inv_d
        hm = h - mean
        # Two-pass variance (no E[h^2]-mean^2 cancellation).  Padded columns of
        # hm equal -mean, contributing n_extra*mean^2; subtract that back out.
        ssq = jnp.sum(hm * hm, axis=-1, keepdims=True)
        if n_extra:
            ssq = ssq - n_extra * (mean * mean)
        var = jnp.maximum(ssq * inv_d, 0.0)
        return hm * jax.lax.rsqrt(var + LN_EPS)

    b1 = b12_ref[0:1, :].astype(jnp.float32)
    b2 = b12_ref[1:2, :].astype(jnp.float32)

    h = block(x, w1_ref, b1)
    h = block(h, w2_ref, b2)

    hc = h.astype(wo_ref.dtype)
    logits = (jnp.dot(hc, wo_ref[...], preferred_element_type=jnp.float32)
              + bo_ref[...].astype(jnp.float32))
    out_ref[...] = logits.astype(out_ref.dtype)


def prepare_params(params, param_dtype=jnp.bfloat16):
    """Fold LN affines into the following linear layers, pad d_model and n_cls
    to lane-dense multiples of 128 (zero rows/cols), pack small bias rows, and
    cast weights (bf16 is fine on v5e/v6e/v7x: MXU takes bf16 natively and all
    element-wise math stays f32 in the kernel).

    `params` uses the PyTorch convention:
      w1, w2: [d_model, d_model] (out, in); wo: [n_cls, d_model]
      b1, b2: [d_model]; bo: [n_cls]; g1, be1, g2, be2: [d_model] (LN affine)
    """
    w1, b1 = params["w1"], params["b1"]
    w2, b2 = params["w2"], params["b2"]
    wo, bo = params["wo"], params["bo"]
    g1, be1 = params["g1"], params["be1"]
    g2, be2 = params["g2"], params["be2"]

    d_model = int(w1.shape[0])
    n_cls = int(wo.shape[0])
    d_pad = _round_up(d_model, 128)
    n_pad = _round_up(n_cls, 128)

    # (n * g + be) @ W^T + b  ==  n @ (g[:, None] * W^T) + (be @ W^T + b)
    w1_t = w1.T                              # [d_in, d_out]
    w2_f = g1[:, None] * w2.T                # [d_in, d_out]
    b2_f = be1 @ w2.T + b2                   # [d_out]
    wo_f = g2[:, None] * wo.T                # [d_model, n_cls]
    bo_f = be2 @ wo.T + bo                   # [n_cls]

    w1_p = jnp.zeros((d_pad, d_pad), jnp.float32).at[:d_model, :d_model].set(w1_t)
    w2_p = jnp.zeros((d_pad, d_pad), jnp.float32).at[:d_model, :d_model].set(w2_f)
    wo_p = jnp.zeros((d_pad, n_pad), jnp.float32).at[:d_model, :n_cls].set(wo_f)
    b12_p = (jnp.zeros((2, d_pad), jnp.float32)
             .at[0, :d_model].set(b1).at[1, :d_model].set(b2_f))
    bo_p = jnp.zeros((1, n_pad), jnp.float32).at[0, :n_cls].set(bo_f)

    return {
        "w1": w1_p.astype(param_dtype),
        "w2": w2_p.astype(param_dtype),
        "wo": wo_p.astype(param_dtype),
        "b12": b12_p,                        # [2, d_pad] f32
        "bo": bo_p,                          # [1, n_pad] f32
        "n_cls": n_cls,
        "d_model": d_model,
        "d_pad": d_pad,
    }


def adversarial_discriminator(x, prepared, *, tile_m=512):
    """x: [batch, d_model] float32. `prepared` comes from prepare_params()."""
    batch, d_model = x.shape
    assert d_model == prepared["d_model"]
    d_pad = prepared["d_pad"]
    n_pad = prepared["bo"].shape[1]
    n_cls = prepared["n_cls"]
    w_dtype = prepared["w1"].dtype
    w_itemsize = jnp.dtype(w_dtype).itemsize

    # Stream x in the weight dtype (bf16 halves the per-tile streamed traffic);
    # pad the feature dim to the lane-dense d_pad with zero columns.
    x = x.astype(w_dtype)
    if d_pad != d_model:
        x = jnp.pad(x, ((0, 0), (0, d_pad - d_model)))

    # Batch tiling: multiple of 8 sublanes; aim for >=4 tiles when batch allows
    # so both v7x TensorCores get work and the x/out pipeline actually overlaps.
    batch8 = _round_up(batch, 8)
    tm = min(tile_m, max(8, _round_up((batch8 + 3) // 4, 8)))
    batch_p = _round_up(batch8, tm)
    if batch_p != batch:
        x = jnp.pad(x, ((0, batch_p - batch), (0, 0)))
    grid = (batch_p // tm,)

    # VMEM budget: single-buffered resident weights + double-buffered x/out
    # tiles + f32 intermediate headroom; cap at ~80% of physical VMEM/core.
    w_bytes = (2 * d_pad * d_pad + d_pad * n_pad) * w_itemsize
    b_bytes = (2 * d_pad + n_pad) * 4
    io_bytes = 2 * tm * (d_pad * w_itemsize + n_pad * 4)
    scratch_bytes = 4 * tm * d_pad * 4
    vmem_budget = int(w_bytes + b_bytes + io_bytes + scratch_bytes + (4 << 20))
    vmem_limit = min(max(vmem_budget, 16 << 20), int(_vmem_cap_bytes() * 0.8))

    cost = pl.CostEstimate(
        flops=2 * batch_p * (2 * d_pad * d_pad + d_pad * n_pad),
        transcendentals=2 * batch_p,
        bytes_accessed=int(batch_p * d_pad * w_itemsize
                           + batch_p * n_pad * 4 + w_bytes + b_bytes),
    )

    def resident(shape, single_buffer):
        if single_buffer:
            # Fetched once (constant index_map): no need for a second buffer.
            return pl.BlockSpec(shape, lambda i: (0, 0),
                                pipeline_mode=pl.Buffered(1))
        return pl.BlockSpec(shape, lambda i: (0, 0))

    def build(single_buffer):
        return pl.pallas_call(
            partial(_disc_kernel, d_model=d_model),
            out_shape=jax.ShapeDtypeStruct((batch_p, n_pad), jnp.float32),
            grid=grid,
            in_specs=[
                pl.BlockSpec((tm, d_pad), lambda i: (i, 0)),      # x tile
                resident((d_pad, d_pad), single_buffer),          # w1
                resident((d_pad, d_pad), single_buffer),          # w2 (g1/be1 folded)
                resident((d_pad, n_pad), single_buffer),          # wo (g2/be2 folded)
                resident((2, d_pad), single_buffer),              # packed b1/b2
                resident((1, n_pad), single_buffer),              # bo
            ],
            out_specs=pl.BlockSpec((tm, n_pad), lambda i: (i, 0)),
            compiler_params=pltpu.CompilerParams(
                dimension_semantics=("parallel",),
                vmem_limit_bytes=vmem_limit,
            ),
            cost_estimate=cost,
        )

    args = (x, prepared["w1"], prepared["w2"], prepared["wo"],
            prepared["b12"], prepared["bo"])
    try:
        out_p = build(single_buffer=True)(*args)
    except Exception:
        # Fallback if this JAX build rejects Buffered(1) single-buffering.
        out_p = build(single_buffer=False)(*args)

    return out_p[:batch, :n_cls]


def init_params(key, d_model, n_cls):
    """Deterministic synthetic params in the PyTorch convention (W: [out, in])."""
    keys = jax.random.split(key, 10)
    s = 1.0 / jnp.sqrt(d_model)
    return {
        "w1": jax.random.uniform(keys[0], (d_model, d_model), jnp.float32, -s, s),
        "b1": jax.random.uniform(keys[1], (d_model,), jnp.float32, -s, s),
        "w2": jax.random.uniform(keys[2], (d_model, d_model), jnp.float32, -s, s),
        "b2": jax.random.uniform(keys[3], (d_model,), jnp.float32, -s, s),
        "wo": jax.random.uniform(keys[4], (n_cls, d_model), jnp.float32, -s, s),
        "bo": jax.random.uniform(keys[5], (n_cls,), jnp.float32, -s, s),
        # LN affines randomized so the gamma/beta folding is actually exercised.
        "g1": jax.random.uniform(keys[6], (d_model,), jnp.float32, 0.5, 1.5),
        "be1": jax.random.uniform(keys[7], (d_model,), jnp.float32, -0.5, 0.5),
        "g2": jax.random.uniform(keys[8], (d_model,), jnp.float32, 0.5, 1.5),
        "be2": jax.random.uniform(keys[9], (d_model,), jnp.float32, -0.5, 0.5),
    }


def _reference(x, p):
    """Pure-JAX f32 reference matching the PyTorch module (unfolded params)."""
    def block(h, w, b, g, be):
        h = h @ w.T + b
        h = jnp.where(h >= 0, h, LEAKY_SLOPE * h)
        m = jnp.mean(h, axis=-1, keepdims=True)
        v = jnp.mean((h - m) ** 2, axis=-1, keepdims=True)
        return (h - m) / jnp.sqrt(v + LN_EPS) * g + be
    h = block(x, p["w1"], p["b1"], p["g1"], p["be1"])
    h = block(h, p["w2"], p["b2"], p["g2"], p["be2"])
    return h @ p["wo"].T + p["bo"]


if __name__ == "__main__":
    batch, d_model, n_cls = 8, 64, 8
    key = jax.random.PRNGKey(0)
    kx, kp = jax.random.split(key)
    x = jax.random.normal(kx, (batch, d_model), jnp.float32)
    params = init_params(kp, d_model, n_cls)
    ref = _reference(x, params)

    # f32 weights: tight check of kernel math + affine folding + d/n padding.
    out32 = adversarial_discriminator(x, prepare_params(params, jnp.float32))
    out32 = jax.block_until_ready(out32)
    assert out32.shape == (batch, n_cls)
    assert jnp.allclose(out32, ref, atol=1e-4, rtol=1e-4)

    # bf16 weights + bf16-streamed x: relaxed tolerance for bf16 matmul inputs.
    out16 = adversarial_discriminator(x, prepare_params(params, jnp.bfloat16))
    out16 = jax.block_until_ready(out16)
    assert out16.shape == (batch, n_cls)
    assert jnp.allclose(out16, ref, atol=5e-2, rtol=5e-2)

    print("KERNEL_OK")
</pallas_src>

<mosaic_0001>
module attributes {stable_mosaic.version = 11 : i64} {
  func.func @_disc_kernel(%arg0: i32, %arg1: memref<8x128xf32, #tpu.memory_space<vmem>>, %arg2: memref<128x128xf32, #tpu.memory_space<vmem>>, %arg3: memref<128x128xf32, #tpu.memory_space<vmem>>, %arg4: memref<128x128xf32, #tpu.memory_space<vmem>>, %arg5: memref<2x128xf32, #tpu.memory_space<vmem>>, %arg6: memref<1x128xf32, #tpu.memory_space<vmem>>, %arg7: memref<8x128xf32, #tpu.memory_space<vmem>>) attributes {dimension_semantics = [#tpu.dimension_semantics<parallel>], iteration_bounds = array<i64: 1>, scalar_prefetch = 0 : i64, scratch_operands = 0 : i64, tpu.core_type = #tpu.core_type<tc>, window_params = [{transform_indices = @transform_0, window_bounds = array<i64: 8, 128>}, {pipeline_mode = #tpu.pipeline_mode<synchronous>, transform_indices = @transform_1, window_bounds = array<i64: 128, 128>}, {pipeline_mode = #tpu.pipeline_mode<synchronous>, transform_indices = @transform_2, window_bounds = array<i64: 128, 128>}, {pipeline_mode = #tpu.pipeline_mode<synchronous>, transform_indices = @transform_3, window_bounds = array<i64: 128, 128>}, {pipeline_mode = #tpu.pipeline_mode<synchronous>, transform_indices = @transform_4, window_bounds = array<i64: 2, 128>}, {pipeline_mode = #tpu.pipeline_mode<synchronous>, transform_indices = @transform_5, window_bounds = array<i64: 1, 128>}, {transform_indices = @transform_6, window_bounds = array<i64: 8, 128>}]} {
    %c0 = arith.constant 0 : index
    %c0_0 = arith.constant 0 : index
    %0 = vector.load %arg1[%c0, %c0_0] : memref<8x128xf32, #tpu.memory_space<vmem>>, vector<8x128xf32>
    %c0_1 = arith.constant 0 : index
    %c0_2 = arith.constant 0 : index
    %1 = vector.load %arg5[%c0_1, %c0_2] : memref<2x128xf32, #tpu.memory_space<vmem>>, vector<1x128xf32>
    %c1 = arith.constant 1 : index
    %c0_3 = arith.constant 0 : index
    %2 = vector.load %arg5[%c1, %c0_3] : memref<2x128xf32, #tpu.memory_space<vmem>>, vector<1x128xf32>
    %c0_4 = arith.constant 0 : index
    %c0_5 = arith.constant 0 : index
    %3 = vector.load %arg2[%c0_4, %c0_5] : memref<128x128xf32, #tpu.memory_space<vmem>>, vector<128x128xf32>
    %cst = arith.constant dense<0.000000e+00> : vector<8x128xf32>
    %4 = tpu.matmul %0, %3, %cst {dimension_numbers = #tpu.dot_dimension_numbers<[1], [0], [0], [1], [0, 0, 1, 1], [], []>} : vector<8x128xf32>, vector<128x128xf32>, vector<8x128xf32> -> vector<8x128xf32>
    %5 = vector.broadcast %1 : vector<1x128xf32> to vector<8x128xf32>
    %6 = arith.addf %4, %5 : vector<8x128xf32>
    %cst_6 = arith.constant 0.00999999977 : f32
    %7 = vector.broadcast %cst_6 : f32 to vector<8x128xf32>
    %8 = arith.mulf %7, %6 : vector<8x128xf32>
    %9 = arith.maximumf %6, %8 : vector<8x128xf32>
    %cst_7 = arith.constant dense<0.000000e+00> : vector<8xf32>
    %10 = vector.multi_reduction <add>, %9, %cst_7 [1] : vector<8x128xf32> to vector<8xf32>
    %11 = vector.shape_cast %10 : vector<8xf32> to vector<8x1xf32>
    %cst_8 = arith.constant 1.562500e-02 : f32
    %12 = vector.broadcast %cst_8 : f32 to vector<8x1xf32>
    %13 = arith.mulf %11, %12 : vector<8x1xf32>
    %14 = vector.broadcast %13 : vector<8x1xf32> to vector<8x128xf32>
    %15 = arith.subf %9, %14 : vector<8x128xf32>
    %16 = arith.mulf %15, %15 : vector<8x128xf32>
    %cst_9 = arith.constant dense<0.000000e+00> : vector<8xf32>
    %17 = vector.multi_reduction <add>, %16, %cst_9 [1] : vector<8x128xf32> to vector<8xf32>
    %18 = vector.shape_cast %17 : vector<8xf32> to vector<8x1xf32>
    %19 = arith.mulf %13, %13 : vector<8x1xf32>
    %cst_10 = arith.constant 6.400000e+01 : f32
    %20 = vector.broadcast %cst_10 : f32 to vector<8x1xf32>
    %21 = arith.mulf %20, %19 : vector<8x1xf32>
    %22 = arith.subf %18, %21 : vector<8x1xf32>
    %cst_11 = arith.constant 1.562500e-02 : f32
    %23 = vector.broadcast %cst_11 : f32 to vector<8x1xf32>
    %24 = arith.mulf %22, %23 : vector<8x1xf32>
    %cst_12 = arith.constant 0.000000e+00 : f32
    %25 = vector.broadcast %cst_12 : f32 to vector<8x1xf32>
    %26 = arith.maximumf %24, %25 : vector<8x1xf32>
    %cst_13 = arith.constant 9.99999974E-6 : f32
    %27 = vector.broadcast %cst_13 : f32 to vector<8x1xf32>
    %28 = arith.addf %26, %27 : vector<8x1xf32>
    %29 = math.rsqrt %28 : vector<8x1xf32>
    %30 = vector.broadcast %29 : vector<8x1xf32> to vector<8x128xf32>
    %31 = arith.mulf %15, %30 : vector<8x128xf32>
    %c0_14 = arith.constant 0 : index
    %c0_15 = arith.constant 0 : index
    %32 = vector.load %arg3[%c0_14, %c0_15] : memref<128x128xf32, #tpu.memory_space<vmem>>, vector<128x128xf32>
    %cst_16 = arith.constant dense<0.000000e+00> : vector<8x128xf32>
    %33 = tpu.matmul %31, %32, %cst_16 {dimension_numbers = #tpu.dot_dimension_numbers<[1], [0], [0], [1], [0, 0, 1, 1], [], []>} : vector<8x128xf32>, vector<128x128xf32>, vector<8x128xf32> -> vector<8x128xf32>
    %34 = vector.broadcast %2 : vector<1x128xf32> to vector<8x128xf32>
    %35 = arith.addf %33, %34 : vector<8x128xf32>
    %cst_17 = arith.constant 0.00999999977 : f32
    %36 = vector.broadcast %cst_17 : f32 to vector<8x128xf32>
    %37 = arith.mulf %36, %35 : vector<8x128xf32>
    %38 = arith.maximumf %35, %37 : vector<8x128xf32>
    %cst_18 = arith.constant dense<0.000000e+00> : vector<8xf32>
    %39 = vector.multi_reduction <add>, %38, %cst_18 [1] : vector<8x128xf32> to vector<8xf32>
    %40 = vector.shape_cast %39 : vector<8xf32> to vector<8x1xf32>
    %cst_19 = arith.constant 1.562500e-02 : f32
    %41 = vector.broadcast %cst_19 : f32 to vector<8x1xf32>
    %42 = arith.mulf %40, %41 : vector<8x1xf32>
    %43 = vector.broadcast %42 : vector<8x1xf32> to vector<8x128xf32>
    %44 = arith.subf %38, %43 : vector<8x128xf32>
    %45 = arith.mulf %44, %44 : vector<8x128xf32>
    %cst_20 = arith.constant dense<0.000000e+00> : vector<8xf32>
    %46 = vector.multi_reduction <add>, %45, %cst_20 [1] : vector<8x128xf32> to vector<8xf32>
    %47 = vector.shape_cast %46 : vector<8xf32> to vector<8x1xf32>
    %48 = arith.mulf %42, %42 : vector<8x1xf32>
    %cst_21 = arith.constant 6.400000e+01 : f32
    %49 = vector.broadcast %cst_21 : f32 to vector<8x1xf32>
    %50 = arith.mulf %49, %48 : vector<8x1xf32>
    %51 = arith.subf %47, %50 : vector<8x1xf32>
    %cst_22 = arith.constant 1.562500e-02 : f32
    %52 = vector.broadcast %cst_22 : f32 to vector<8x1xf32>
    %53 = arith.mulf %51, %52 : vector<8x1xf32>
    %cst_23 = arith.constant 0.000000e+00 : f32
    %54 = vector.broadcast %cst_23 : f32 to vector<8x1xf32>
    %55 = arith.maximumf %53, %54 : vector<8x1xf32>
    %cst_24 = arith.constant 9.99999974E-6 : f32
    %56 = vector.broadcast %cst_24 : f32 to vector<8x1xf32>
    %57 = arith.addf %55, %56 : vector<8x1xf32>
    %58 = math.rsqrt %57 : vector<8x1xf32>
    %59 = vector.broadcast %58 : vector<8x1xf32> to vector<8x128xf32>
    %60 = arith.mulf %44, %59 : vector<8x128xf32>
    %c0_25 = arith.constant 0 : index
    %c0_26 = arith.constant 0 : index
    %61 = vector.load %arg4[%c0_25, %c0_26] : memref<128x128xf32, #tpu.memory_space<vmem>>, vector<128x128xf32>
    %cst_27 = arith.constant dense<0.000000e+00> : vector<8x128xf32>
    %62 = tpu.matmul %60, %61, %cst_27 {dimension_numbers = #tpu.dot_dimension_numbers<[1], [0], [0], [1], [0, 0, 1, 1], [], []>} : vector<8x128xf32>, vector<128x128xf32>, vector<8x128xf32> -> vector<8x128xf32>
    %c0_28 = arith.constant 0 : index
    %c0_29 = arith.constant 0 : index
    %63 = vector.load %arg6[%c0_28, %c0_29] : memref<1x128xf32, #tpu.memory_space<vmem>>, vector<1x128xf32>
    %64 = vector.broadcast %63 : vector<1x128xf32> to vector<8x128xf32>
    %65 = arith.addf %62, %64 : vector<8x128xf32>
    %c0_30 = arith.constant 0 : index
    %c0_31 = arith.constant 0 : index
    %66 = vector.load %arg7[%c0_30, %c0_31] : memref<8x128xf32, #tpu.memory_space<vmem>>, vector<8x128xf32>
    tpu.vector_store %arg7[%c0_30, %c0_31], %65 {strides = array<i32>} : memref<8x128xf32, #tpu.memory_space<vmem>>, vector<8x128xf32>,
    return
  }
  func.func @transform_0(%arg0: i32) -> (i32, i32) {
    %c0_i32 = arith.constant 0 : i32
    %c0_i32_0 = arith.constant 0 : i32
    return %arg0, %c0_i32 : i32, i32
  }
  func.func @transform_1(%arg0: i32) -> (i32, i32) {
    %c0_i32 = arith.constant 0 : i32
    %c0_i32_0 = arith.constant 0 : i32
    %c0_i32_1 = arith.constant 0 : i32
    return %c0_i32, %c0_i32_0 : i32, i32
  }
  func.func @transform_2(%arg0: i32) -> (i32, i32) {
    %c0_i32 = arith.constant 0 : i32
    %c0_i32_0 = arith.constant 0 : i32
    %c0_i32_1 = arith.constant 0 : i32
    return %c0_i32, %c0_i32_0 : i32, i32
  }
  func.func @transform_3(%arg0: i32) -> (i32, i32) {
    %c0_i32 = arith.constant 0 : i32
    %c0_i32_0 = arith.constant 0 : i32
    %c0_i32_1 = arith.constant 0 : i32
    return %c0_i32, %c0_i32_0 : i32, i32
  }
  func.func @transform_4(%arg0: i32) -> (i32, i32) {
    %c0_i32 = arith.constant 0 : i32
    %c0_i32_0 = arith.constant 0 : i32
    %c0_i32_1 = arith.constant 0 : i32
    return %c0_i32, %c0_i32_0 : i32, i32
  }
  func.func @transform_5(%arg0: i32) -> (i32, i32) {
    %c0_i32 = arith.constant 0 : i32
    %c0_i32_0 = arith.constant 0 : i32
    %c0_i32_1 = arith.constant 0 : i32
    return %c0_i32, %c0_i32_0 : i32, i32
  }
  func.func @transform_6(%arg0: i32) -> (i32, i32) {
    %c0_i32 = arith.constant 0 : i32
    %c0_i32_0 = arith.constant 0 : i32
    return %arg0, %c0_i32 : i32, i32
  }
}

module attributes {stable_mosaic.version = 11 : i64} {
  func.func @_disc_kernel(%arg0: i32, %arg1: memref<8x128xf32, #tpu.memory_space<vmem>>, %arg2: memref<128x128xf32, #tpu.memory_space<vmem>>, %arg3: memref<128x128xf32, #tpu.memory_space<vmem>>, %arg4: memref<128x128xf32, #tpu.memory_space<vmem>>, %arg5: memref<2x128xf32, #tpu.memory_space<vmem>>, %arg6: memref<1x128xf32, #tpu.memory_space<vmem>>, %arg7: memref<8x128xf32, #tpu.memory_space<vmem>>) attributes {dimension_semantics = [#tpu.dimension_semantics<parallel>], iteration_bounds = array<i64: 1>, scalar_prefetch = 0 : i64, scratch_operands = 0 : i64, tpu.core_type = #tpu.core_type<tc>, window_params = [{transform_indices = @transform_0, window_bounds = array<i64: 8, 128>}, {pipeline_mode = #tpu.pipeline_mode<synchronous>, transform_indices = @transform_1, window_bounds = array<i64: 128, 128>}, {pipeline_mode = #tpu.pipeline_mode<synchronous>, transform_indices = @transform_2, window_bounds = array<i64: 128, 128>}, {pipeline_mode = #tpu.pipeline_mode<synchronous>, transform_indices = @transform_3, window_bounds = array<i64: 128, 128>}, {pipeline_mode = #tpu.pipeline_mode<synchronous>, transform_indices = @transform_4, window_bounds = array<i64: 2, 128>}, {pipeline_mode = #tpu.pipeline_mode<synchronous>, transform_indices = @transform_5, window_bounds = array<i64: 1, 128>}, {transform_indices = @transform_6, window_bounds = array<i64: 8, 128>}]} {
    %c0 = arith.constant 0 : index
    %c0_0 = arith.constant 0 : index
    %0 = vector.load %arg1[%c0, %c0_0] : memref<8x128xf32, #tpu.memory_space<vmem>>, vector<8x128xf32>
    %c0_1 = arith.constant 0 : index
    %c0_2 = arith.constant 0 : index
    %1 = vector.load %arg5[%c0_1, %c0_2] : memref<2x128xf32, #tpu.memory_space<vmem>>, vector<1x128xf32>
    %c1 = arith.constant 1 : index
    %c0_3 = arith.constant 0 : index
    %2 = vector.load %arg5[%c1, %c0_3] : memref<2x128xf32, #tpu.memory_space<vmem>>, vector<1x128xf32>
    %c0_4 = arith.constant 0 : index
    %c0_5 = arith.constant 0 : index
    %3 = vector.load %arg2[%c0_4, %c0_5] : memref<128x128xf32, #tpu.memory_space<vmem>>, vector<128x128xf32>
    %cst = arith.constant dense<0.000000e+00> : vector<8x128xf32>
    %4 = tpu.matmul %0, %3, %cst {dimension_numbers = #tpu.dot_dimension_numbers<[1], [0], [0], [1], [0, 0, 1, 1], [], []>} : vector<8x128xf32>, vector<128x128xf32>, vector<8x128xf32> -> vector<8x128xf32>
    %5 = vector.broadcast %1 : vector<1x128xf32> to vector<8x128xf32>
    %6 = arith.addf %4, %5 : vector<8x128xf32>
    %cst_6 = arith.constant 0.00999999977 : f32
    %7 = vector.broadcast %cst_6 : f32 to vector<8x128xf32>
    %8 = arith.mulf %7, %6 : vector<8x128xf32>
    %9 = arith.maximumf %6, %8 : vector<8x128xf32>
    %cst_7 = arith.constant dense<0.000000e+00> : vector<8xf32>
    %10 = vector.multi_reduction <add>, %9, %cst_7 [1] : vector<8x128xf32> to vector<8xf32>
    %11 = vector.shape_cast %10 : vector<8xf32> to vector<8x1xf32>
    %cst_8 = arith.constant 1.562500e-02 : f32
    %12 = vector.broadcast %cst_8 : f32 to vector<8x1xf32>
    %13 = arith.mulf %11, %12 : vector<8x1xf32>
    %14 = vector.broadcast %13 : vector<8x1xf32> to vector<8x128xf32>
    %15 = arith.subf %9, %14 : vector<8x128xf32>
    %16 = arith.mulf %15, %15 : vector<8x128xf32>
    %cst_9 = arith.constant dense<0.000000e+00> : vector<8xf32>
    %17 = vector.multi_reduction <add>, %16, %cst_9 [1] : vector<8x128xf32> to vector<8xf32>
    %18 = vector.shape_cast %17 : vector<8xf32> to vector<8x1xf32>
    %19 = arith.mulf %13, %13 : vector<8x1xf32>
    %cst_10 = arith.constant 6.400000e+01 : f32
    %20 = vector.broadcast %cst_10 : f32 to vector<8x1xf32>
    %21 = arith.mulf %20, %19 : vector<8x1xf32>
    %22 = arith.subf %18, %21 : vector<8x1xf32>
    %cst_11 = arith.constant 1.562500e-02 : f32
    %23 = vector.broadcast %cst_11 : f32 to vector<8x1xf32>
    %24 = arith.mulf %22, %23 : vector<8x1xf32>
    %cst_12 = arith.constant 0.000000e+00 : f32
    %25 = vector.broadcast %cst_12 : f32 to vector<8x1xf32>
    %26 = arith.maximumf %24, %25 : vector<8x1xf32>
    %cst_13 = arith.constant 9.99999974E-6 : f32
    %27 = vector.broadcast %cst_13 : f32 to vector<8x1xf32>
    %28 = arith.addf %26, %27 : vector<8x1xf32>
    %29 = math.rsqrt %28 : vector<8x1xf32>
    %30 = vector.broadcast %29 : vector<8x1xf32> to vector<8x128xf32>
    %31 = arith.mulf %15, %30 : vector<8x128xf32>
    %c0_14 = arith.constant 0 : index
    %c0_15 = arith.constant 0 : index
    %32 = vector.load %arg3[%c0_14, %c0_15] : memref<128x128xf32, #tpu.memory_space<vmem>>, vector<128x128xf32>
    %cst_16 = arith.constant dense<0.000000e+00> : vector<8x128xf32>
    %33 = tpu.matmul %31, %32, %cst_16 {dimension_numbers = #tpu.dot_dimension_numbers<[1], [0], [0], [1], [0, 0, 1, 1], [], []>} : vector<8x128xf32>, vector<128x128xf32>, vector<8x128xf32> -> vector<8x128xf32>
    %34 = vector.broadcast %2 : vector<1x128xf32> to vector<8x128xf32>
    %35 = arith.addf %33, %34 : vector<8x128xf32>
    %cst_17 = arith.constant 0.00999999977 : f32
    %36 = vector.broadcast %cst_17 : f32 to vector<8x128xf32>
    %37 = arith.mulf %36, %35 : vector<8x128xf32>
    %38 = arith.maximumf %35, %37 : vector<8x128xf32>
    %cst_18 = arith.constant dense<0.000000e+00> : vector<8xf32>
    %39 = vector.multi_reduction <add>, %38, %cst_18 [1] : vector<8x128xf32> to vector<8xf32>
    %40 = vector.shape_cast %39 : vector<8xf32> to vector<8x1xf32>
    %cst_19 = arith.constant 1.562500e-02 : f32
    %41 = vector.broadcast %cst_19 : f32 to vector<8x1xf32>
    %42 = arith.mulf %40, %41 : vector<8x1xf32>
    %43 = vector.broadcast %42 : vector<8x1xf32> to vector<8x128xf32>
    %44 = arith.subf %38, %43 : vector<8x128xf32>
    %45 = arith.mulf %44, %44 : vector<8x128xf32>
    %cst_20 = arith.constant dense<0.000000e+00> : vector<8xf32>
    %46 = vector.multi_reduction <add>, %45, %cst_20 [1] : vector<8x128xf32> to vector<8xf32>
    %47 = vector.shape_cast %46 : vector<8xf32> to vector<8x1xf32>
    %48 = arith.mulf %42, %42 : vector<8x1xf32>
    %cst_21 = arith.constant 6.400000e+01 : f32
    %49 = vector.broadcast %cst_21 : f32 to vector<8x1xf32>
    %50 = arith.mulf %49, %48 : vector<8x1xf32>
    %51 = arith.subf %47, %50 : vector<8x1xf32>
    %cst_22 = arith.constant 1.562500e-02 : f32
    %52 = vector.broadcast %cst_22 : f32 to vector<8x1xf32>
    %53 = arith.mulf %51, %52 : vector<8x1xf32>
    %cst_23 = arith.constant 0.000000e+00 : f32
    %54 = vector.broadcast %cst_23 : f32 to vector<8x1xf32>
    %55 = arith.maximumf %53, %54 : vector<8x1xf32>
    %cst_24 = arith.constant 9.99999974E-6 : f32
    %56 = vector.broadcast %cst_24 : f32 to vector<8x1xf32>
    %57 = arith.addf %55, %56 : vector<8x1xf32>
    %58 = math.rsqrt %57 : vector<8x1xf32>
    %59 = vector.broadcast %58 : vector<8x1xf32> to vector<8x128xf32>
    %60 = arith.mulf %44, %59 : vector<8x128xf32>
    %c0_25 = arith.constant 0 : index
    %c0_26 = arith.constant 0 : index
    %61 = vector.load %arg4[%c0_25, %c0_26] : memref<128x128xf32, #tpu.memory_space<vmem>>, vector<128x128xf32>
    %cst_27 = arith.constant dense<0.000000e+00> : vector<8x128xf32>
    %62 = tpu.matmul %60, %61, %cst_27 {dimension_numbers = #tpu.dot_dimension_numbers<[1], [0], [0], [1], [0, 0, 1, 1], [], []>} : vector<8x128xf32>, vector<128x128xf32>, vector<8x128xf32> -> vector<8x128xf32>
    %c0_28 = arith.constant 0 : index
    %c0_29 = arith.constant 0 : index
    %63 = vector.load %arg6[%c0_28, %c0_29] : memref<1x128xf32, #tpu.memory_space<vmem>>, vector<1x128xf32>
    %64 = vector.broadcast %63 : vector<1x128xf32> to vector<8x128xf32>
    %65 = arith.addf %62, %64 : vector<8x128xf32>
    %c0_30 = arith.constant 0 : index
    %c0_31 = arith.constant 0 : index
    %66 = vector.load %arg7[%c0_30, %c0_31] : memref<8x128xf32, #tpu.memory_space<vmem>>, vector<8x128xf32>
    tpu.vector_store %arg7[%c0_30, %c0_31], %65 {strides = array<i32>} : memref<8x128xf32, #tpu.memory_space<vmem>>, vector<8x128xf32>,
    return
  }
  func.func @transform_0(%arg0: i32) -> (i32, i32) {
    %c0_i32 = arith.constant 0 : i32
    %c0_i32_0 = arith.constant 0 : i32
    return %arg0, %c0_i32 : i32, i32
  }
  func.func @transform_1(%arg0: i32) -> (i32, i32) {
    %c0_i32 = arith.constant 0 : i32
    %c0_i32_0 = arith.constant 0 : i32
    %c0_i32_1 = arith.constant 0 : i32
    return %c0_i32, %c0_i32_0 : i32, i32
  }
  func.func @transform_2(%arg0: i32) -> (i32, i32) {
    %c0_i32 = arith.constant 0 : i32
    %c0_i32_0 = arith.constant 0 : i32
    %c0_i32_1 = arith.constant 0 : i32
    return %c0_i32, %c0_i32_0 : i32, i32
  }
  func.func @transform_3(%arg0: i32) -> (i32, i32) {
    %c0_i32 = arith.constant 0 : i32
    %c0_i32_0 = arith.constant 0 : i32
    %c0_i32_1 = arith.constant 0 : i32
    return %c0_i32, %c0_i32_0 : i32, i32
  }
  func.func @transform_4(%arg0: i32) -> (i32, i32) {
    %c0_i32 = arith.constant 0 : i32
    %c0_i32_0 = arith.constant 0 : i32
    %c0_i32_1 = arith.constant 0 : i32
    return %c0_i32, %c0_i32_0 : i32, i32
  }
  func.func @transform_5(%arg0: i32) -> (i32, i32) {
    %c0_i32 = arith.constant 0 : i32
    %c0_i32_0 = arith.constant 0 : i32
    %c0_i32_1 = arith.constant 0 : i32
    return %c0_i32, %c0_i32_0 : i32, i32
  }
  func.func @transform_6(%arg0: i32) -> (i32, i32) {
    %c0_i32 = arith.constant 0 : i32
    %c0_i32_0 = arith.constant 0 : i32
    return %arg0, %c0_i32 : i32, i32
  }
}

</mosaic_0001>

<llo_original>
// kernel: tpu_custom_call.1
$region0: #{tpu_custom_call.1}
  #allocation0 [shape = 'u32[]', space=smem, size = 0x4, offset = 0x4, fixed_abs, tag = 'smem constant byte address 0x4 - core index']
  #allocation1 [shape = 'u32[144,128]{1,0:T(1,128)}', space=vmem, size = 0x12000, scoped, tag = 'internal scratch']
  %s0 = inlined_call_operand.hbm [shape: f32[8,128], index: 0, kind: input, shape index: {}]
  %s1 = inlined_call_operand.hbm [shape: f32[128,128], index: 1, kind: input, shape index: {}]
  %s2 = inlined_call_operand.hbm [shape: f32[128,128], index: 2, kind: input, shape index: {}]
  %s3 = inlined_call_operand.hbm [shape: f32[128,128], index: 3, kind: input, shape index: {}]
  %s4 = inlined_call_operand.vmem [shape: f32[2,128], index: 4, kind: input, shape index: {}]
  %s5 = inlined_call_operand.vmem [shape: f32[1,128], index: 5, kind: input, shape index: {}]
  %s6 = inlined_call_operand.hbm [shape: f32[8,128], index: 6, kind: output, shape index: {}]
  %s7 = sld [smem:[#allocation0]]
  $region50: #{tpu_custom_call.1} parent=0
    _
  %s9 = ssub.s32 1, %s7
  %s10 = scalar_select 0, %s9, %s7
  $region1: #{tpu_custom_call.1} parent=0
    #allocation2 [shape = 'u8[4096]{0}', space=vmem, size = 0x1000, scoped, tag = 'input window, operand 0, single buffered']
    #allocation3 [shape = 's32[1]{0}', space=sflag, size = 0x4, scoped, tag = 'scoped memory for tpu_custom_call.1']
    #allocation4 [shape = 's32[1]{0}', space=sflag, size = 0x4, scoped, tag = 'scoped memory for tpu_custom_call.1']
    #allocation5 [shape = 'u8[65536]{0}', space=vmem, size = 0x10000, scoped, tag = 'input window, operand 1, single buffered']
    #allocation6 [shape = 's32[1]{0}', space=sflag, size = 0x4, scoped, tag = 'scoped memory for tpu_custom_call.1']
    #allocation7 [shape = 'u8[65536]{0}', space=vmem, size = 0x10000, scoped, tag = 'input window, operand 2, single buffered']
    #allocation8 [shape = 'u8[65536]{0}', space=vmem, size = 0x10000, scoped, tag = 'input window, operand 3, single buffered']
    #allocation9 [shape = 's32[1]{0}', space=sflag, size = 0x4, scoped, tag = 'scoped memory for tpu_custom_call.1']
    #allocation10 [shape = 'u8[4096]{0}', space=vmem, size = 0x1000, scoped, tag = 'output window, operand 0, single buffered']
    %11 = vsyncpa [#allocation3], 0
    %12 = vsyncpa [#allocation6], 0
    %13 = vsyncpa [#allocation9], 0
    %14 = vsyncpa [#allocation4], 0
    // Predicated region
    $region2: #{tpu_custom_call.1} parent=1 // pred_check
      _
    $region3: #{tpu_custom_call.1} parent=1 // pred_check_branch
      %16 = sbr.rel (0) target = $region5
    $region4: #{tpu_custom_call.1} parent=1 // pred_region
      %s18 = ssub.s32 128, 128
      %19 = vsyncadd [#allocation3], %s18
      %s21 = sshll.u32 [#allocation2], 4
      %s22 = int_to_ptr.vmem [resolvable:$true] %s21
      %24 = dma.hbm_to_vmem [thread:$0]  %s0, 128, %s22, [#allocation3]
    $region5: #{tpu_custom_call.1} parent=1 // pred_fallthru
      _
    // Predicated region
    $region6: #{tpu_custom_call.1} parent=1 // pred_check
      _
    $region7: #{tpu_custom_call.1} parent=1 // pred_check_branch
      %26 = sbr.rel (0) target = $region9
    $region8: #{tpu_custom_call.1} parent=1 // pred_region
      %s28 = ssub.s32 2048, 2048
      %29 = vsyncadd [#allocation6], %s28
      %s30 = sshll.u32 [#allocation5], 4
      %s31 = int_to_ptr.vmem [resolvable:$true] %s30
      %36 = dma.hbm_to_vmem [thread:$0]  %s1, 2048, %s31, [#allocation6], 128, 128, 8
    $region9: #{tpu_custom_call.1} parent=1 // pred_fallthru
      _
    // Predicated region
    $region10: #{tpu_custom_call.1} parent=1 // pred_check
      _
    $region11: #{tpu_custom_call.1} parent=1 // pred_check_branch
      %38 = sbr.rel (0) target = $region13
    $region12: #{tpu_custom_call.1} parent=1 // pred_region
      %s40 = ssub.s32 2048, 2048
      %41 = vsyncadd [#allocation6], %s40
      %s42 = sshll.u32 [#allocation7], 4
      %s43 = int_to_ptr.vmem [resolvable:$true] %s42
      %48 = dma.hbm_to_vmem [thread:$0]  %s2, 2048, %s43, [#allocation6], 128, 128, 8
    $region13: #{tpu_custom_call.1} parent=1 // pred_fallthru
      _
    // Predicated region
    $region14: #{tpu_custom_call.1} parent=1 // pred_check
      _
    $region15: #{tpu_custom_call.1} parent=1 // pred_check_branch
      %50 = sbr.rel (0) target = $region17
    $region16: #{tpu_custom_call.1} parent=1 // pred_region
      %s52 = ssub.s32 2048, 2048
      %53 = vsyncadd [#allocation9], %s52
      %s54 = sshll.u32 [#allocation8], 4
      %s55 = int_to_ptr.vmem [resolvable:$true] %s54
      %60 = dma.hbm_to_vmem [thread:$0]  %s3, 2048, %s55, [#allocation9], 128, 128, 8
    $region17: #{tpu_custom_call.1} parent=1 // pred_fallthru
      _
    // Predicated region
    $region18: #{tpu_custom_call.1} parent=1 // pred_check
      _
    $region19: #{tpu_custom_call.1} parent=1 // pred_check_branch
      %62 = sbr.rel (0) target = $region21
    $region20: #{tpu_custom_call.1} parent=1 // pred_region
      _
    $region21: #{tpu_custom_call.1} parent=1 // pred_fallthru
      _
    // Predicated region
    $region22: #{tpu_custom_call.1} parent=1 // pred_check
      _
    $region23: #{tpu_custom_call.1} parent=1 // pred_check_branch
      %64 = sbr.rel (0) target = $region25
    $region24: #{tpu_custom_call.1} parent=1 // pred_region
      _
    $region25: #{tpu_custom_call.1} parent=1 // pred_fallthru
      _
    // Predicated region
    $region26: #{tpu_custom_call.1} parent=1 // pred_check
      _
    $region27: #{tpu_custom_call.1} parent=1 // pred_check_branch
      %66 = sbr.rel (0) target = $region29
    $region28: #{tpu_custom_call.1} parent=1 // pred_region
      %67 = dma.done [#allocation3], 128
    $region29: #{tpu_custom_call.1} parent=1 // pred_fallthru
      _
    // Predicated region
    $region30: #{tpu_custom_call.1} parent=1 // pred_check
      _
    $region31: #{tpu_custom_call.1} parent=1 // pred_check_branch
      %69 = sbr.rel (0) target = $region33
    $region32: #{tpu_custom_call.1} parent=1 // pred_region
      %70 = dma.done [#allocation6], 2048
    $region33: #{tpu_custom_call.1} parent=1 // pred_fallthru
      _
    // Predicated region
    $region34: #{tpu_custom_call.1} parent=1 // pred_check
      _
    $region35: #{tpu_custom_call.1} parent=1 // pred_check_branch
      %72 = sbr.rel (0) target = $region37
    $region36: #{tpu_custom_call.1} parent=1 // pred_region
      %73 = dma.done [#allocation6], 2048
    $region37: #{tpu_custom_call.1} parent=1 // pred_fallthru
      _
    // Predicated region
    $region38: #{tpu_custom_call.1} parent=1 // pred_check
      _
    $region39: #{tpu_custom_call.1} parent=1 // pred_check_branch
      %75 = sbr.rel (0) target = $region41
    $region40: #{tpu_custom_call.1} parent=1 // pred_region
      %76 = dma.done [#allocation9], 2048
    $region41: #{tpu_custom_call.1} parent=1 // pred_fallthru
      _
    %v77 = vld [vmem:[#allocation2] sm:$0xff]
    %v78 = vld [vmem:[%s4] sm:$0x1]
    %v79 = vld [vmem:[%s4 + $0x1] sm:$0x1]
    %v80 = vld [vmem:[#allocation5] sm:$0xff]
    %v81 = vld [vmem:[#allocation5 + $0x8] sm:$0xff]
    %v82 = vld [vmem:[#allocation5 + $0x10] sm:$0xff]
    %v83 = vld [vmem:[#allocation5 + $0x18] sm:$0xff]
    %v84 = vld [vmem:[#allocation5 + $0x20] sm:$0xff]
    %v85 = vld [vmem:[#allocation5 + $0x28] sm:$0xff]
    %v86 = vld [vmem:[#allocation5 + $0x30] sm:$0xff]
    %v87 = vld [vmem:[#allocation5 + $0x38] sm:$0xff]
    %v88 = vld [vmem:[#allocation5 + $0x40] sm:$0xff]
    %v89 = vld [vmem:[#allocation5 + $0x48] sm:$0xff]
    %v90 = vld [vmem:[#allocation5 + $0x50] sm:$0xff]
    %v91 = vld [vmem:[#allocation5 + $0x58] sm:$0xff]
    %v92 = vld [vmem:[#allocation5 + $0x60] sm:$0xff]
    %v93 = vld [vmem:[#allocation5 + $0x68] sm:$0xff]
    %v94 = vld [vmem:[#allocation5 + $0x70] sm:$0xff]
    %v95 = vld [vmem:[#allocation5 + $0x78] sm:$0xff]
    %v96 = vlaneseq
    %v97 = vshrl.u32 %v96, 7
    %v98 = vsub.s32 0, %v97
    %v99 = vrot.slane %v78, %v98
    %100 = vmatprep.subr.mxu0 0.0
    %101 = vmatpush1.msra.mxu0 %v95
    %102 = vmatprep.subr.mxu0 0.0
    %103 = vmatpush1.msra.mxu0 %v94
    %104 = vmatprep.subr.mxu0 0.0
    %105 = vmatpush1.msra.mxu0 %v93
    %106 = vmatprep.subr.mxu0 0.0
    %107 = vmatpush1.msra.mxu0 %v92
    %108 = vmatprep.subr.mxu0 0.0
    %109 = vmatpush1.msra.mxu0 %v91
    %110 = vmatprep.subr.mxu0 0.0
    %111 = vmatpush1.msra.mxu0 %v90
    %112 = vmatprep.subr.mxu0 0.0
    %113 = vmatpush1.msra.mxu0 %v89
    %114 = vmatprep.subr.mxu0 0.0
    %115 = vmatpush1.msra.mxu0 %v88
    %116 = vmatprep.subr.mxu0 0.0
    %117 = vmatpush1.msra.mxu0 %v87
    %118 = vmatprep.subr.mxu0 0.0
    %119 = vmatpush1.msra.mxu0 %v86
    %120 = vmatprep.subr.mxu0 0.0
    %121 = vmatpush1.msra.mxu0 %v85
    %122 = vmatprep.subr.mxu0 0.0
    %123 = vmatpush1.msra.mxu0 %v84
    %124 = vmatprep.subr.mxu0 0.0
    %125 = vmatpush1.msra.mxu0 %v83
    %126 = vmatprep.subr.mxu0 0.0
    %127 = vmatpush1.msra.mxu0 %v82
    %128 = vmatprep.subr.mxu0 0.0
    %129 = vmatpush1.msra.mxu0 %v81
    %130 = vmatprep.subr.mxu0 0.0
    %131 = vmatpush1.msra.mxu0 %v80
    %132 = vmatprep.subr.mxu0 0.0
    %133 = vmatpush2.msra.mxu0 0.0
    %134 = vmatprep.subr.mxu0 0.0
    %135 = vmatpush2.msra.mxu0 0.0
    %136 = vmatprep.subr.mxu0 0.0
    %137 = vmatpush2.msra.mxu0 0.0
    %138 = vmatprep.subr.mxu0 0.0
    %139 = vmatpush2.msra.mxu0 0.0
    %140 = vmatprep.subr.mxu0 0.0
    %141 = vmatpush2.msra.mxu0 0.0
    %142 = vmatprep.subr.mxu0 0.0
    %143 = vmatpush2.msra.mxu0 0.0
    %144 = vmatprep.subr.mxu0 0.0
    %145 = vmatpush2.msra.mxu0 0.0
    %146 = vmatprep.subr.mxu0 0.0
    %147 = vmatpush2.msra.mxu0 0.0
    %148 = vmatprep.subr.mxu0 0.0
    %149 = vmatpush2.msra.mxu0 0.0
    %150 = vmatprep.subr.mxu0 0.0
    %151 = vmatpush2.msra.mxu0 0.0
    %152 = vmatprep.subr.mxu0 0.0
    %153 = vmatpush2.msra.mxu0 0.0
    %154 = vmatprep.subr.mxu0 0.0
    %155 = vmatpush2.msra.mxu0 0.0
    %156 = vmatprep.subr.mxu0 0.0
    %157 = vmatpush2.msra.mxu0 0.0
    %158 = vmatprep.subr.mxu0 0.0
    %159 = vmatpush2.msra.mxu0 0.0
    %160 = vmatprep.subr.mxu0 0.0
    %161 = vmatpush2.msra.mxu0 0.0
    %162 = vmatprep.subr.mxu0 0.0
    %163 = vmatpush2.msra.mxu0 0.0
    %164 = vmatprep.mubr.f32.mxu0 0.0
    %165 = vmatmul.mubr.f32.gmra.mxu0 %v77
    %v166 = vpop.f32.mrf.mxu0
    %v167 = vadd.f32 %v99, %v166
    %v168 = vpop.f32.mrf.mxu0
    %169 = vdwg.mxu0
    %v170 = vmul.f32 %v167, 0.01
    %v171 = vmax.f32 %v167, %v170
    %172 = vadd.xlane.f32.xlu0 %v171
    %v173 = vpop.xlane.xlu0 %172
    %v174 = vmul.f32 %v173, 0.015625
    %v175 = vsub.f32 %v171, %v174
    %v176 = vmul.f32 %v175, %v175
    %177 = vadd.xlane.f32.xlu0 %v176
    %v178 = vpop.xlane.xlu0 %177
    %v179 = vmul.f32 %v174, %v174
    %v180 = vmul.f32 %v179, 64.0
    %v181 = vsub.f32 %v178, %v180
    %v182 = vmul.f32 %v181, 0.015625
    %v183 = vmax.f32 %v182, 0.0
    %v184 = vadd.f32 %v183, 1e-05
    %v185 = vrsqrt.pop %v184
    %v186 = vmul.f32 %v175, %v185
    %v187 = vld [vmem:[#allocation7] sm:$0xff]
    %v188 = vld [vmem:[#allocation7 + $0x8] sm:$0xff]
    %v189 = vld [vmem:[#allocation7 + $0x10] sm:$0xff]
    %v190 = vld [vmem:[#allocation7 + $0x18] sm:$0xff]
    %v191 = vld [vmem:[#allocation7 + $0x20] sm:$0xff]
    %v192 = vld [vmem:[#allocation7 + $0x28] sm:$0xff]
    %v193 = vld [vmem:[#allocation7 + $0x30] sm:$0xff]
    %v194 = vld [vmem:[#allocation7 + $0x38] sm:$0xff]
    %v195 = vld [vmem:[#allocation7 + $0x40] sm:$0xff]
    %v196 = vld [vmem:[#allocation7 + $0x48] sm:$0xff]
    %v197 = vld [vmem:[#allocation7 + $0x50] sm:$0xff]
    %v198 = vld [vmem:[#allocation7 + $0x58] sm:$0xff]
    %v199 = vld [vmem:[#allocation7 + $0x60] sm:$0xff]
    %v200 = vld [vmem:[#allocation7 + $0x68] sm:$0xff]
    %v201 = vld [vmem:[#allocation7 + $0x70] sm:$0xff]
    %v202 = vld [vmem:[#allocation7 + $0x78] sm:$0xff]
    %v203 = vlaneseq
    %v204 = vshrl.u32 %v203, 7
    %v205 = vsub.s32 0, %v204
    %v206 = vrot.slane %v79, %v205
    %207 = vmatprep.subr.mxu0 0.0
    %208 = vmatpush1.msra.mxu0 %v202
    %209 = vmatprep.subr.mxu0 0.0
    %210 = vmatpush1.msra.mxu0 %v201
    %211 = vmatprep.subr.mxu0 0.0
    %212 = vmatpush1.msra.mxu0 %v200
    %213 = vmatprep.subr.mxu0 0.0
    %214 = vmatpush1.msra.mxu0 %v199
    %215 = vmatprep.subr.mxu0 0.0
    %216 = vmatpush1.msra.mxu0 %v198
    %217 = vmatprep.subr.mxu0 0.0
    %218 = vmatpush1.msra.mxu0 %v197
    %219 = vmatprep.subr.mxu0 0.0
    %220 = vmatpush1.msra.mxu0 %v196
    %221 = vmatprep.subr.mxu0 0.0
    %222 = vmatpush1.msra.mxu0 %v195
    %223 = vmatprep.subr.mxu0 0.0
    %224 = vmatpush1.msra.mxu0 %v194
    %225 = vmatprep.subr.mxu0 0.0
    %226 = vmatpush1.msra.mxu0 %v193
    %227 = vmatprep.subr.mxu0 0.0
    %228 = vmatpush1.msra.mxu0 %v192
    %229 = vmatprep.subr.mxu0 0.0
    %230 = vmatpush1.msra.mxu0 %v191
    %231 = vmatprep.subr.mxu0 0.0
    %232 = vmatpush1.msra.mxu0 %v190
    %233 = vmatprep.subr.mxu0 0.0
    %234 = vmatpush1.msra.mxu0 %v189
    %235 = vmatprep.subr.mxu0 0.0
    %236 = vmatpush1.msra.mxu0 %v188
    %237 = vmatprep.subr.mxu0 0.0
    %238 = vmatpush1.msra.mxu0 %v187
    %239 = vmatprep.subr.mxu0 0.0
    %240 = vmatpush2.msra.mxu0 0.0
    %241 = vmatprep.subr.mxu0 0.0
    %242 = vmatpush2.msra.mxu0 0.0
    %243 = vmatprep.subr.mxu0 0.0
    %244 = vmatpush2.msra.mxu0 0.0
    %245 = vmatprep.subr.mxu0 0.0
    %246 = vmatpush2.msra.mxu0 0.0
    %247 = vmatprep.subr.mxu0 0.0
    %248 = vmatpush2.msra.mxu0 0.0
    %249 = vmatprep.subr.mxu0 0.0
    %250 = vmatpush2.msra.mxu0 0.0
    %251 = vmatprep.subr.mxu0 0.0
    %252 = vmatpush2.msra.mxu0 0.0
    %253 = vmatprep.subr.mxu0 0.0
    %254 = vmatpush2.msra.mxu0 0.0
    %255 = vmatprep.subr.mxu0 0.0
    %256 = vmatpush2.msra.mxu0 0.0
    %257 = vmatprep.subr.mxu0 0.0
    %258 = vmatpush2.msra.mxu0 0.0
    %259 = vmatprep.subr.mxu0 0.0
    %260 = vmatpush2.msra.mxu0 0.0
    %261 = vmatprep.subr.mxu0 0.0
    %262 = vmatpush2.msra.mxu0 0.0
    %263 = vmatprep.subr.mxu0 0.0
    %264 = vmatpush2.msra.mxu0 0.0
    %265 = vmatprep.subr.mxu0 0.0
    %266 = vmatpush2.msra.mxu0 0.0
    %267 = vmatprep.subr.mxu0 0.0
    %268 = vmatpush2.msra.mxu0 0.0
    %269 = vmatprep.subr.mxu0 0.0
    %270 = vmatpush2.msra.mxu0 0.0
    %271 = vmatprep.mubr.f32.mxu0 0.0
    %272 = vmatmul.mubr.f32.gmra.mxu0 %v186
    %v273 = vpop.f32.mrf.mxu0
    %v274 = vadd.f32 %v206, %v273
    %v275 = vpop.f32.mrf.mxu0
    %276 = vdwg.mxu0
    %v277 = vmul.f32 %v274, 0.01
    %v278 = vmax.f32 %v274, %v277
    %279 = vadd.xlane.f32.xlu0 %v278
    %v280 = vpop.xlane.xlu0 %279
    %v281 = vmul.f32 %v280, 0.015625
    %v282 = vsub.f32 %v278, %v281
    %v283 = vmul.f32 %v282, %v282
    %284 = vadd.xlane.f32.xlu0 %v283
    %v285 = vpop.xlane.xlu0 %284
    %v286 = vmul.f32 %v281, %v281
    %v287 = vmul.f32 %v286, 64.0
    %v288 = vsub.f32 %v285, %v287
    %v289 = vmul.f32 %v288, 0.015625
    %v290 = vmax.f32 %v289, 0.0
    %v291 = vadd.f32 %v290, 1e-05
    %v292 = vrsqrt.pop %v291
    %v293 = vmul.f32 %v282, %v292
    %v294 = vld [vmem:[#allocation8] sm:$0xff]
    %v295 = vld [vmem:[#allocation8 + $0x8] sm:$0xff]
    %v296 = vld [vmem:[#allocation8 + $0x10] sm:$0xff]
    %v297 = vld [vmem:[#allocation8 + $0x18] sm:$0xff]
    %v298 = vld [vmem:[#allocation8 + $0x20] sm:$0xff]
    %v299 = vld [vmem:[#allocation8 + $0x28] sm:$0xff]
    %v300 = vld [vmem:[#allocation8 + $0x30] sm:$0xff]
    %v301 = vld [vmem:[#allocation8 + $0x38] sm:$0xff]
    %v302 = vld [vmem:[#allocation8 + $0x40] sm:$0xff]
    %v303 = vld [vmem:[#allocation8 + $0x48] sm:$0xff]
    %v304 = vld [vmem:[#allocation8 + $0x50] sm:$0xff]
    %v305 = vld [vmem:[#allocation8 + $0x58] sm:$0xff]
    %v306 = vld [vmem:[#allocation8 + $0x60] sm:$0xff]
    %v307 = vld [vmem:[#allocation8 + $0x68] sm:$0xff]
    %v308 = vld [vmem:[#allocation8 + $0x70] sm:$0xff]
    %v309 = vld [vmem:[#allocation8 + $0x78] sm:$0xff]
    %v310 = vld [vmem:[%s5] sm:$0x1]
    %v312 = vlaneseq
    %v313 = vshrl.u32 %v312, 7
    %v314 = vsub.s32 0, %v313
    %v315 = vrot.slane %v310, %v314
    %317 = vmatprep.subr.mxu0 0.0
    %318 = vmatpush1.msra.mxu0 %v309
    %319 = vmatprep.subr.mxu0 0.0
    %320 = vmatpush1.msra.mxu0 %v308
    %321 = vmatprep.subr.mxu0 0.0
    %322 = vmatpush1.msra.mxu0 %v307
    %323 = vmatprep.subr.mxu0 0.0
    %324 = vmatpush1.msra.mxu0 %v306
    %325 = vmatprep.subr.mxu0 0.0
    %326 = vmatpush1.msra.mxu0 %v305
    %327 = vmatprep.subr.mxu0 0.0
    %328 = vmatpush1.msra.mxu0 %v304
    %329 = vmatprep.subr.mxu0 0.0
    %330 = vmatpush1.msra.mxu0 %v303
    %331 = vmatprep.subr.mxu0 0.0
    %332 = vmatpush1.msra.mxu0 %v302
    %333 = vmatprep.subr.mxu0 0.0
    %334 = vmatpush1.msra.mxu0 %v301
    %335 = vmatprep.subr.mxu0 0.0
    %336 = vmatpush1.msra.mxu0 %v300
    %337 = vmatprep.subr.mxu0 0.0
    %338 = vmatpush1.msra.mxu0 %v299
    %339 = vmatprep.subr.mxu0 0.0
    %340 = vmatpush1.msra.mxu0 %v298
    %341 = vmatprep.subr.mxu0 0.0
    %342 = vmatpush1.msra.mxu0 %v297
    %343 = vmatprep.subr.mxu0 0.0
    %344 = vmatpush1.msra.mxu0 %v296
    %345 = vmatprep.subr.mxu0 0.0
    %346 = vmatpush1.msra.mxu0 %v295
    %347 = vmatprep.subr.mxu0 0.0
    %348 = vmatpush1.msra.mxu0 %v294
    %349 = vmatprep.subr.mxu0 0.0
    %350 = vmatpush2.msra.mxu0 0.0
    %351 = vmatprep.subr.mxu0 0.0
    %352 = vmatpush2.msra.mxu0 0.0
    %353 = vmatprep.subr.mxu0 0.0
    %354 = vmatpush2.msra.mxu0 0.0
    %355 = vmatprep.subr.mxu0 0.0
    %356 = vmatpush2.msra.mxu0 0.0
    %357 = vmatprep.subr.mxu0 0.0
    %358 = vmatpush2.msra.mxu0 0.0
    %359 = vmatprep.subr.mxu0 0.0
    %360 = vmatpush2.msra.mxu0 0.0
    %361 = vmatprep.subr.mxu0 0.0
    %362 = vmatpush2.msra.mxu0 0.0
    %363 = vmatprep.subr.mxu0 0.0
    %364 = vmatpush2.msra.mxu0 0.0
    %365 = vmatprep.subr.mxu0 0.0
    %366 = vmatpush2.msra.mxu0 0.0
    %367 = vmatprep.subr.mxu0 0.0
    %368 = vmatpush2.msra.mxu0 0.0
    %369 = vmatprep.subr.mxu0 0.0
    %370 = vmatpush2.msra.mxu0 0.0
    %371 = vmatprep.subr.mxu0 0.0
    %372 = vmatpush2.msra.mxu0 0.0
    %373 = vmatprep.subr.mxu0 0.0
    %374 = vmatpush2.msra.mxu0 0.0
    %375 = vmatprep.subr.mxu0 0.0
    %376 = vmatpush2.msra.mxu0 0.0
    %377 = vmatprep.subr.mxu0 0.0
    %378 = vmatpush2.msra.mxu0 0.0
    %379 = vmatprep.subr.mxu0 0.0
    %380 = vmatpush2.msra.mxu0 0.0
    %381 = vmatprep.mubr.f32.mxu0 0.0
    %382 = vmatmul.mubr.f32.gmra.mxu0 %v293
    %v383 = vpop.f32.mrf.mxu0
    %v384 = vadd.f32 %v315, %v383
    %v385 = vpop.f32.mrf.mxu0
    %386 = vdwg.mxu0
    %387 = vst [vmem:[#allocation10] sm:$0xff] %v384
    // Predicated region
    $region42: #{tpu_custom_call.1} parent=1 // pred_check
      _
    $region43: #{tpu_custom_call.1} parent=1 // pred_check_branch
      %389 = sbr.rel (0) target = $region45
    $region44: #{tpu_custom_call.1} parent=1 // pred_region
      %s391 = ssub.s32 128, 128
      %392 = vsyncadd [#allocation4], %s391
      %s394 = sshll.u32 [#allocation10], 4
      %s395 = int_to_ptr.vmem [resolvable:$true] %s394
      %397 = dma.vmem_to_hbm [thread:$0]  %s395, 128, %s6, [#allocation4]
    $region45: #{tpu_custom_call.1} parent=1 // pred_fallthru
      _
    // Predicated region
    $region46: #{tpu_custom_call.1} parent=1 // pred_check
      _
    $region47: #{tpu_custom_call.1} parent=1 // pred_check_branch
      %399 = sbr.rel (0) target = $region49
    $region48: #{tpu_custom_call.1} parent=1 // pred_region
      %400 = dma.done [#allocation4], 128
    $region49: #{tpu_custom_call.1} parent=1 // pred_fallthru
      _
    %401 = vsyncpa [#allocation3], 1
    %402 = vsyncpa [#allocation6], 1
    %403 = vsyncpa [#allocation9], 1
    %404 = vsyncpa [#allocation4], 1

// kernel: tpu_custom_call.1
$region0: #{tpu_custom_call.1}
  #allocation0 [shape = 'u32[]', space=smem, size = 0x4, offset = 0x4, fixed_abs, tag = 'smem constant byte address 0x4 - core index']
  #allocation1 [shape = 'u32[144,128]{1,0:T(1,128)}', space=vmem, size = 0x12000, scoped, tag = 'internal scratch']
  %s0 = inlined_call_operand.hbm [shape: f32[8,128], index: 0, kind: input, shape index: {}]
  %s1 = inlined_call_operand.hbm [shape: f32[128,128], index: 1, kind: input, shape index: {}]
  %s2 = inlined_call_operand.hbm [shape: f32[128,128], index: 2, kind: input, shape index: {}]
  %s3 = inlined_call_operand.hbm [shape: f32[128,128], index: 3, kind: input, shape index: {}]
  %s4 = inlined_call_operand.vmem [shape: f32[2,128], index: 4, kind: input, shape index: {}]
  %s5 = inlined_call_operand.vmem [shape: f32[1,128], index: 5, kind: input, shape index: {}]
  %s6 = inlined_call_operand.hbm [shape: f32[8,128], index: 6, kind: output, shape index: {}]
  %s7 = sld [smem:[#allocation0]]
  $region50: #{tpu_custom_call.1} parent=0
    _
  %s9 = ssub.s32 1, %s7
  %s10 = scalar_select 0, %s9, %s7
  $region1: #{tpu_custom_call.1} parent=0
    #allocation2 [shape = 'u8[4096]{0}', space=vmem, size = 0x1000, scoped, tag = 'input window, operand 0, single buffered']
    #allocation3 [shape = 's32[1]{0}', space=sflag, size = 0x4, scoped, tag = 'scoped memory for tpu_custom_call.1']
    #allocation4 [shape = 's32[1]{0}', space=sflag, size = 0x4, scoped, tag = 'scoped memory for tpu_custom_call.1']
    #allocation5 [shape = 'u8[65536]{0}', space=vmem, size = 0x10000, scoped, tag = 'input window, operand 1, single buffered']
    #allocation6 [shape = 's32[1]{0}', space=sflag, size = 0x4, scoped, tag = 'scoped memory for tpu_custom_call.1']
    #allocation7 [shape = 'u8[65536]{0}', space=vmem, size = 0x10000, scoped, tag = 'input window, operand 2, single buffered']
    #allocation8 [shape = 'u8[65536]{0}', space=vmem, size = 0x10000, scoped, tag = 'input window, operand 3, single buffered']
    #allocation9 [shape = 's32[1]{0}', space=sflag, size = 0x4, scoped, tag = 'scoped memory for tpu_custom_call.1']
    #allocation10 [shape = 'u8[4096]{0}', space=vmem, size = 0x1000, scoped, tag = 'output window, operand 0, single buffered']
    %11 = vsyncpa [#allocation3], 0
    %12 = vsyncpa [#allocation6], 0
    %13 = vsyncpa [#allocation9], 0
    %14 = vsyncpa [#allocation4], 0
    // Predicated region
    $region2: #{tpu_custom_call.1} parent=1 // pred_check
      _
    $region3: #{tpu_custom_call.1} parent=1 // pred_check_branch
      %16 = sbr.rel (0) target = $region5
    $region4: #{tpu_custom_call.1} parent=1 // pred_region
      %s18 = ssub.s32 128, 128
      %19 = vsyncadd [#allocation3], %s18
      %s21 = sshll.u32 [#allocation2], 4
      %s22 = int_to_ptr.vmem [resolvable:$true] %s21
      %24 = dma.hbm_to_vmem [thread:$0]  %s0, 128, %s22, [#allocation3]
    $region5: #{tpu_custom_call.1} parent=1 // pred_fallthru
      _
    // Predicated region
    $region6: #{tpu_custom_call.1} parent=1 // pred_check
      _
    $region7: #{tpu_custom_call.1} parent=1 // pred_check_branch
      %26 = sbr.rel (0) target = $region9
    $region8: #{tpu_custom_call.1} parent=1 // pred_region
      %s28 = ssub.s32 2048, 2048
      %29 = vsyncadd [#allocation6], %s28
      %s30 = sshll.u32 [#allocation5], 4
      %s31 = int_to_ptr.vmem [resolvable:$true] %s30
      %36 = dma.hbm_to_vmem [thread:$0]  %s1, 2048, %s31, [#allocation6], 128, 128, 8
    $region9: #{tpu_custom_call.1} parent=1 // pred_fallthru
      _
    // Predicated region
    $region10: #{tpu_custom_call.1} parent=1 // pred_check
      _
    $region11: #{tpu_custom_call.1} parent=1 // pred_check_branch
      %38 = sbr.rel (0) target = $region13
    $region12: #{tpu_custom_call.1} parent=1 // pred_region
      %s40 = ssub.s32 2048, 2048
      %41 = vsyncadd [#allocation6], %s40
      %s42 = sshll.u32 [#allocation7], 4
      %s43 = int_to_ptr.vmem [resolvable:$true] %s42
      %48 = dma.hbm_to_vmem [thread:$0]  %s2, 2048, %s43, [#allocation6], 128, 128, 8
    $region13: #{tpu_custom_call.1} parent=1 // pred_fallthru
      _
    // Predicated region
    $region14: #{tpu_custom_call.1} parent=1 // pred_check
      _
    $region15: #{tpu_custom_call.1} parent=1 // pred_check_branch
      %50 = sbr.rel (0) target = $region17
    $region16: #{tpu_custom_call.1} parent=1 // pred_region
      %s52 = ssub.s32 2048, 2048
      %53 = vsyncadd [#allocation9], %s52
      %s54 = sshll.u32 [#allocation8], 4
      %s55 = int_to_ptr.vmem [resolvable:$true] %s54
      %60 = dma.hbm_to_vmem [thread:$0]  %s3, 2048, %s55, [#allocation9], 128, 128, 8
    $region17: #{tpu_custom_call.1} parent=1 // pred_fallthru
      _
    // Predicated region
    $region18: #{tpu_custom_call.1} parent=1 // pred_check
      _
    $region19: #{tpu_custom_call.1} parent=1 // pred_check_branch
      %62 = sbr.rel (0) target = $region21
    $region20: #{tpu_custom_call.1} parent=1 // pred_region
      _
    $region21: #{tpu_custom_call.1} parent=1 // pred_fallthru
      _
    // Predicated region
    $region22: #{tpu_custom_call.1} parent=1 // pred_check
      _
    $region23: #{tpu_custom_call.1} parent=1 // pred_check_branch
      %64 = sbr.rel (0) target = $region25
    $region24: #{tpu_custom_call.1} parent=1 // pred_region
      _
    $region25: #{tpu_custom_call.1} parent=1 // pred_fallthru
      _
    // Predicated region
    $region26: #{tpu_custom_call.1} parent=1 // pred_check
      _
    $region27: #{tpu_custom_call.1} parent=1 // pred_check_branch
      %66 = sbr.rel (0) target = $region29
    $region28: #{tpu_custom_call.1} parent=1 // pred_region
      %67 = dma.done [#allocation3], 128
    $region29: #{tpu_custom_call.1} parent=1 // pred_fallthru
      _
    // Predicated region
    $region30: #{tpu_custom_call.1} parent=1 // pred_check
      _
    $region31: #{tpu_custom_call.1} parent=1 // pred_check_branch
      %69 = sbr.rel (0) target = $region33
    $region32: #{tpu_custom_call.1} parent=1 // pred_region
      %70 = dma.done [#allocation6], 2048
    $region33: #{tpu_custom_call.1} parent=1 // pred_fallthru
      _
    // Predicated region
    $region34: #{tpu_custom_call.1} parent=1 // pred_check
      _
    $region35: #{tpu_custom_call.1} parent=1 // pred_check_branch
      %72 = sbr.rel (0) target = $region37
    $region36: #{tpu_custom_call.1} parent=1 // pred_region
      %73 = dma.done [#allocation6], 2048
    $region37: #{tpu_custom_call.1} parent=1 // pred_fallthru
      _
    // Predicated region
    $region38: #{tpu_custom_call.1} parent=1 // pred_check
      _
    $region39: #{tpu_custom_call.1} parent=1 // pred_check_branch
      %75 = sbr.rel (0) target = $region41
    $region40: #{tpu_custom_call.1} parent=1 // pred_region
      %76 = dma.done [#allocation9], 2048
    $region41: #{tpu_custom_call.1} parent=1 // pred_fallthru
      _
    %v77 = vld [vmem:[#allocation2] sm:$0xff]
    %v78 = vld [vmem:[%s4] sm:$0x1]
    %v79 = vld [vmem:[%s4 + $0x1] sm:$0x1]
    %v80 = vld [vmem:[#allocation5] sm:$0xff]
    %v81 = vld [vmem:[#allocation5 + $0x8] sm:$0xff]
    %v82 = vld [vmem:[#allocation5 + $0x10] sm:$0xff]
    %v83 = vld [vmem:[#allocation5 + $0x18] sm:$0xff]
    %v84 = vld [vmem:[#allocation5 + $0x20] sm:$0xff]
    %v85 = vld [vmem:[#allocation5 + $0x28] sm:$0xff]
    %v86 = vld [vmem:[#allocation5 + $0x30] sm:$0xff]
    %v87 = vld [vmem:[#allocation5 + $0x38] sm:$0xff]
    %v88 = vld [vmem:[#allocation5 + $0x40] sm:$0xff]
    %v89 = vld [vmem:[#allocation5 + $0x48] sm:$0xff]
    %v90 = vld [vmem:[#allocation5 + $0x50] sm:$0xff]
    %v91 = vld [vmem:[#allocation5 + $0x58] sm:$0xff]
    %v92 = vld [vmem:[#allocation5 + $0x60] sm:$0xff]
    %v93 = vld [vmem:[#allocation5 + $0x68] sm:$0xff]
    %v94 = vld [vmem:[#allocation5 + $0x70] sm:$0xff]
    %v95 = vld [vmem:[#allocation5 + $0x78] sm:$0xff]
    %v96 = vlaneseq
    %v97 = vshrl.u32 %v96, 7
    %v98 = vsub.s32 0, %v97
    %v99 = vrot.slane %v78, %v98
    %100 = vmatprep.subr.mxu0 0.0
    %101 = vmatpush1.msra.mxu0 %v95
    %102 = vmatprep.subr.mxu0 0.0
    %103 = vmatpush1.msra.mxu0 %v94
    %104 = vmatprep.subr.mxu0 0.0
    %105 = vmatpush1.msra.mxu0 %v93
    %106 = vmatprep.subr.mxu0 0.0
    %107 = vmatpush1.msra.mxu0 %v92
    %108 = vmatprep.subr.mxu0 0.0
    %109 = vmatpush1.msra.mxu0 %v91
    %110 = vmatprep.subr.mxu0 0.0
    %111 = vmatpush1.msra.mxu0 %v90
    %112 = vmatprep.subr.mxu0 0.0
    %113 = vmatpush1.msra.mxu0 %v89
    %114 = vmatprep.subr.mxu0 0.0
    %115 = vmatpush1.msra.mxu0 %v88
    %116 = vmatprep.subr.mxu0 0.0
    %117 = vmatpush1.msra.mxu0 %v87
    %118 = vmatprep.subr.mxu0 0.0
    %119 = vmatpush1.msra.mxu0 %v86
    %120 = vmatprep.subr.mxu0 0.0
    %121 = vmatpush1.msra.mxu0 %v85
    %122 = vmatprep.subr.mxu0 0.0
    %123 = vmatpush1.msra.mxu0 %v84
    %124 = vmatprep.subr.mxu0 0.0
    %125 = vmatpush1.msra.mxu0 %v83
    %126 = vmatprep.subr.mxu0 0.0
    %127 = vmatpush1.msra.mxu0 %v82
    %128 = vmatprep.subr.mxu0 0.0
    %129 = vmatpush1.msra.mxu0 %v81
    %130 = vmatprep.subr.mxu0 0.0
    %131 = vmatpush1.msra.mxu0 %v80
    %132 = vmatprep.subr.mxu0 0.0
    %133 = vmatpush2.msra.mxu0 0.0
    %134 = vmatprep.subr.mxu0 0.0
    %135 = vmatpush2.msra.mxu0 0.0
    %136 = vmatprep.subr.mxu0 0.0
    %137 = vmatpush2.msra.mxu0 0.0
    %138 = vmatprep.subr.mxu0 0.0
    %139 = vmatpush2.msra.mxu0 0.0
    %140 = vmatprep.subr.mxu0 0.0
    %141 = vmatpush2.msra.mxu0 0.0
    %142 = vmatprep.subr.mxu0 0.0
    %143 = vmatpush2.msra.mxu0 0.0
    %144 = vmatprep.subr.mxu0 0.0
    %145 = vmatpush2.msra.mxu0 0.0
    %146 = vmatprep.subr.mxu0 0.0
    %147 = vmatpush2.msra.mxu0 0.0
    %148 = vmatprep.subr.mxu0 0.0
    %149 = vmatpush2.msra.mxu0 0.0
    %150 = vmatprep.subr.mxu0 0.0
    %151 = vmatpush2.msra.mxu0 0.0
    %152 = vmatprep.subr.mxu0 0.0
    %153 = vmatpush2.msra.mxu0 0.0
    %154 = vmatprep.subr.mxu0 0.0
    %155 = vmatpush2.msra.mxu0 0.0
    %156 = vmatprep.subr.mxu0 0.0
    %157 = vmatpush2.msra.mxu0 0.0
    %158 = vmatprep.subr.mxu0 0.0
    %159 = vmatpush2.msra.mxu0 0.0
    %160 = vmatprep.subr.mxu0 0.0
    %161 = vmatpush2.msra.mxu0 0.0
    %162 = vmatprep.subr.mxu0 0.0
    %163 = vmatpush2.msra.mxu0 0.0
    %164 = vmatprep.mubr.f32.mxu0 0.0
    %165 = vmatmul.mubr.f32.gmra.mxu0 %v77
    %v166 = vpop.f32.mrf.mxu0
    %v167 = vadd.f32 %v99, %v166
    %v168 = vpop.f32.mrf.mxu0
    %169 = vdwg.mxu0
    %v170 = vmul.f32 %v167, 0.01
    %v171 = vmax.f32 %v167, %v170
    %172 = vadd.xlane.f32.xlu0 %v171
    %v173 = vpop.xlane.xlu0 %172
    %v174 = vmul.f32 %v173, 0.015625
    %v175 = vsub.f32 %v171, %v174
    %v176 = vmul.f32 %v175, %v175
    %177 = vadd.xlane.f32.xlu0 %v176
    %v178 = vpop.xlane.xlu0 %177
    %v179 = vmul.f32 %v174, %v174
    %v180 = vmul.f32 %v179, 64.0
    %v181 = vsub.f32 %v178, %v180
    %v182 = vmul.f32 %v181, 0.015625
    %v183 = vmax.f32 %v182, 0.0
    %v184 = vadd.f32 %v183, 1e-05
    %v185 = vrsqrt.pop %v184
    %v186 = vmul.f32 %v175, %v185
    %v187 = vld [vmem:[#allocation7] sm:$0xff]
    %v188 = vld [vmem:[#allocation7 + $0x8] sm:$0xff]
    %v189 = vld [vmem:[#allocation7 + $0x10] sm:$0xff]
    %v190 = vld [vmem:[#allocation7 + $0x18] sm:$0xff]
    %v191 = vld [vmem:[#allocation7 + $0x20] sm:$0xff]
    %v192 = vld [vmem:[#allocation7 + $0x28] sm:$0xff]
    %v193 = vld [vmem:[#allocation7 + $0x30] sm:$0xff]
    %v194 = vld [vmem:[#allocation7 + $0x38] sm:$0xff]
    %v195 = vld [vmem:[#allocation7 + $0x40] sm:$0xff]
    %v196 = vld [vmem:[#allocation7 + $0x48] sm:$0xff]
    %v197 = vld [vmem:[#allocation7 + $0x50] sm:$0xff]
    %v198 = vld [vmem:[#allocation7 + $0x58] sm:$0xff]
    %v199 = vld [vmem:[#allocation7 + $0x60] sm:$0xff]
    %v200 = vld [vmem:[#allocation7 + $0x68] sm:$0xff]
    %v201 = vld [vmem:[#allocation7 + $0x70] sm:$0xff]
    %v202 = vld [vmem:[#allocation7 + $0x78] sm:$0xff]
    %v203 = vlaneseq
    %v204 = vshrl.u32 %v203, 7
    %v205 = vsub.s32 0, %v204
    %v206 = vrot.slane %v79, %v205
    %207 = vmatprep.subr.mxu0 0.0
    %208 = vmatpush1.msra.mxu0 %v202
    %209 = vmatprep.subr.mxu0 0.0
    %210 = vmatpush1.msra.mxu0 %v201
    %211 = vmatprep.subr.mxu0 0.0
    %212 = vmatpush1.msra.mxu0 %v200
    %213 = vmatprep.subr.mxu0 0.0
    %214 = vmatpush1.msra.mxu0 %v199
    %215 = vmatprep.subr.mxu0 0.0
    %216 = vmatpush1.msra.mxu0 %v198
    %217 = vmatprep.subr.mxu0 0.0
    %218 = vmatpush1.msra.mxu0 %v197
    %219 = vmatprep.subr.mxu0 0.0
    %220 = vmatpush1.msra.mxu0 %v196
    %221 = vmatprep.subr.mxu0 0.0
    %222 = vmatpush1.msra.mxu0 %v195
    %223 = vmatprep.subr.mxu0 0.0
    %224 = vmatpush1.msra.mxu0 %v194
    %225 = vmatprep.subr.mxu0 0.0
    %226 = vmatpush1.msra.mxu0 %v193
    %227 = vmatprep.subr.mxu0 0.0
    %228 = vmatpush1.msra.mxu0 %v192
    %229 = vmatprep.subr.mxu0 0.0
    %230 = vmatpush1.msra.mxu0 %v191
    %231 = vmatprep.subr.mxu0 0.0
    %232 = vmatpush1.msra.mxu0 %v190
    %233 = vmatprep.subr.mxu0 0.0
    %234 = vmatpush1.msra.mxu0 %v189
    %235 = vmatprep.subr.mxu0 0.0
    %236 = vmatpush1.msra.mxu0 %v188
    %237 = vmatprep.subr.mxu0 0.0
    %238 = vmatpush1.msra.mxu0 %v187
    %239 = vmatprep.subr.mxu0 0.0
    %240 = vmatpush2.msra.mxu0 0.0
    %241 = vmatprep.subr.mxu0 0.0
    %242 = vmatpush2.msra.mxu0 0.0
    %243 = vmatprep.subr.mxu0 0.0
    %244 = vmatpush2.msra.mxu0 0.0
    %245 = vmatprep.subr.mxu0 0.0
    %246 = vmatpush2.msra.mxu0 0.0
    %247 = vmatprep.subr.mxu0 0.0
    %248 = vmatpush2.msra.mxu0 0.0
    %249 = vmatprep.subr.mxu0 0.0
    %250 = vmatpush2.msra.mxu0 0.0
    %251 = vmatprep.subr.mxu0 0.0
    %252 = vmatpush2.msra.mxu0 0.0
    %253 = vmatprep.subr.mxu0 0.0
    %254 = vmatpush2.msra.mxu0 0.0
    %255 = vmatprep.subr.mxu0 0.0
    %256 = vmatpush2.msra.mxu0 0.0
    %257 = vmatprep.subr.mxu0 0.0
    %258 = vmatpush2.msra.mxu0 0.0
    %259 = vmatprep.subr.mxu0 0.0
    %260 = vmatpush2.msra.mxu0 0.0
    %261 = vmatprep.subr.mxu0 0.0
    %262 = vmatpush2.msra.mxu0 0.0
    %263 = vmatprep.subr.mxu0 0.0
    %264 = vmatpush2.msra.mxu0 0.0
    %265 = vmatprep.subr.mxu0 0.0
    %266 = vmatpush2.msra.mxu0 0.0
    %267 = vmatprep.subr.mxu0 0.0
    %268 = vmatpush2.msra.mxu0 0.0
    %269 = vmatprep.subr.mxu0 0.0
    %270 = vmatpush2.msra.mxu0 0.0
    %271 = vmatprep.mubr.f32.mxu0 0.0
    %272 = vmatmul.mubr.f32.gmra.mxu0 %v186
    %v273 = vpop.f32.mrf.mxu0
    %v274 = vadd.f32 %v206, %v273
    %v275 = vpop.f32.mrf.mxu0
    %276 = vdwg.mxu0
    %v277 = vmul.f32 %v274, 0.01
    %v278 = vmax.f32 %v274, %v277
    %279 = vadd.xlane.f32.xlu0 %v278
    %v280 = vpop.xlane.xlu0 %279
    %v281 = vmul.f32 %v280, 0.015625
    %v282 = vsub.f32 %v278, %v281
    %v283 = vmul.f32 %v282, %v282
    %284 = vadd.xlane.f32.xlu0 %v283
    %v285 = vpop.xlane.xlu0 %284
    %v286 = vmul.f32 %v281, %v281
    %v287 = vmul.f32 %v286, 64.0
    %v288 = vsub.f32 %v285, %v287
    %v289 = vmul.f32 %v288, 0.015625
    %v290 = vmax.f32 %v289, 0.0
    %v291 = vadd.f32 %v290, 1e-05
    %v292 = vrsqrt.pop %v291
    %v293 = vmul.f32 %v282, %v292
    %v294 = vld [vmem:[#allocation8] sm:$0xff]
    %v295 = vld [vmem:[#allocation8 + $0x8] sm:$0xff]
    %v296 = vld [vmem:[#allocation8 + $0x10] sm:$0xff]
    %v297 = vld [vmem:[#allocation8 + $0x18] sm:$0xff]
    %v298 = vld [vmem:[#allocation8 + $0x20] sm:$0xff]
    %v299 = vld [vmem:[#allocation8 + $0x28] sm:$0xff]
    %v300 = vld [vmem:[#allocation8 + $0x30] sm:$0xff]
    %v301 = vld [vmem:[#allocation8 + $0x38] sm:$0xff]
    %v302 = vld [vmem:[#allocation8 + $0x40] sm:$0xff]
    %v303 = vld [vmem:[#allocation8 + $0x48] sm:$0xff]
    %v304 = vld [vmem:[#allocation8 + $0x50] sm:$0xff]
    %v305 = vld [vmem:[#allocation8 + $0x58] sm:$0xff]
    %v306 = vld [vmem:[#allocation8 + $0x60] sm:$0xff]
    %v307 = vld [vmem:[#allocation8 + $0x68] sm:$0xff]
    %v308 = vld [vmem:[#allocation8 + $0x70] sm:$0xff]
    %v309 = vld [vmem:[#allocation8 + $0x78] sm:$0xff]
    %v310 = vld [vmem:[%s5] sm:$0x1]
    %v312 = vlaneseq
    %v313 = vshrl.u32 %v312, 7
    %v314 = vsub.s32 0, %v313
    %v315 = vrot.slane %v310, %v314
    %317 = vmatprep.subr.mxu0 0.0
    %318 = vmatpush1.msra.mxu0 %v309
    %319 = vmatprep.subr.mxu0 0.0
    %320 = vmatpush1.msra.mxu0 %v308
    %321 = vmatprep.subr.mxu0 0.0
    %322 = vmatpush1.msra.mxu0 %v307
    %323 = vmatprep.subr.mxu0 0.0
    %324 = vmatpush1.msra.mxu0 %v306
    %325 = vmatprep.subr.mxu0 0.0
    %326 = vmatpush1.msra.mxu0 %v305
    %327 = vmatprep.subr.mxu0 0.0
    %328 = vmatpush1.msra.mxu0 %v304
    %329 = vmatprep.subr.mxu0 0.0
    %330 = vmatpush1.msra.mxu0 %v303
    %331 = vmatprep.subr.mxu0 0.0
    %332 = vmatpush1.msra.mxu0 %v302
    %333 = vmatprep.subr.mxu0 0.0
    %334 = vmatpush1.msra.mxu0 %v301
    %335 = vmatprep.subr.mxu0 0.0
    %336 = vmatpush1.msra.mxu0 %v300
    %337 = vmatprep.subr.mxu0 0.0
    %338 = vmatpush1.msra.mxu0 %v299
    %339 = vmatprep.subr.mxu0 0.0
    %340 = vmatpush1.msra.mxu0 %v298
    %341 = vmatprep.subr.mxu0 0.0
    %342 = vmatpush1.msra.mxu0 %v297
    %343 = vmatprep.subr.mxu0 0.0
    %344 = vmatpush1.msra.mxu0 %v296
    %345 = vmatprep.subr.mxu0 0.0
    %346 = vmatpush1.msra.mxu0 %v295
    %347 = vmatprep.subr.mxu0 0.0
    %348 = vmatpush1.msra.mxu0 %v294
    %349 = vmatprep.subr.mxu0 0.0
    %350 = vmatpush2.msra.mxu0 0.0
    %351 = vmatprep.subr.mxu0 0.0
    %352 = vmatpush2.msra.mxu0 0.0
    %353 = vmatprep.subr.mxu0 0.0
    %354 = vmatpush2.msra.mxu0 0.0
    %355 = vmatprep.subr.mxu0 0.0
    %356 = vmatpush2.msra.mxu0 0.0
    %357 = vmatprep.subr.mxu0 0.0
    %358 = vmatpush2.msra.mxu0 0.0
    %359 = vmatprep.subr.mxu0 0.0
    %360 = vmatpush2.msra.mxu0 0.0
    %361 = vmatprep.subr.mxu0 0.0
    %362 = vmatpush2.msra.mxu0 0.0
    %363 = vmatprep.subr.mxu0 0.0
    %364 = vmatpush2.msra.mxu0 0.0
    %365 = vmatprep.subr.mxu0 0.0
    %366 = vmatpush2.msra.mxu0 0.0
    %367 = vmatprep.subr.mxu0 0.0
    %368 = vmatpush2.msra.mxu0 0.0
    %369 = vmatprep.subr.mxu0 0.0
    %370 = vmatpush2.msra.mxu0 0.0
    %371 = vmatprep.subr.mxu0 0.0
    %372 = vmatpush2.msra.mxu0 0.0
    %373 = vmatprep.subr.mxu0 0.0
    %374 = vmatpush2.msra.mxu0 0.0
    %375 = vmatprep.subr.mxu0 0.0
    %376 = vmatpush2.msra.mxu0 0.0
    %377 = vmatprep.subr.mxu0 0.0
    %378 = vmatpush2.msra.mxu0 0.0
    %379 = vmatprep.subr.mxu0 0.0
    %380 = vmatpush2.msra.mxu0 0.0
    %381 = vmatprep.mubr.f32.mxu0 0.0
    %382 = vmatmul.mubr.f32.gmra.mxu0 %v293
    %v383 = vpop.f32.mrf.mxu0
    %v384 = vadd.f32 %v315, %v383
    %v385 = vpop.f32.mrf.mxu0
    %386 = vdwg.mxu0
    %387 = vst [vmem:[#allocation10] sm:$0xff] %v384
    // Predicated region
    $region42: #{tpu_custom_call.1} parent=1 // pred_check
      _
    $region43: #{tpu_custom_call.1} parent=1 // pred_check_branch
      %389 = sbr.rel (0) target = $region45
    $region44: #{tpu_custom_call.1} parent=1 // pred_region
      %s391 = ssub.s32 128, 128
      %392 = vsyncadd [#allocation4], %s391
      %s394 = sshll.u32 [#allocation10], 4
      %s395 = int_to_ptr.vmem [resolvable:$true] %s394
      %397 = dma.vmem_to_hbm [thread:$0]  %s395, 128, %s6, [#allocation4]
    $region45: #{tpu_custom_call.1} parent=1 // pred_fallthru
      _
    // Predicated region
    $region46: #{tpu_custom_call.1} parent=1 // pred_check
      _
    $region47: #{tpu_custom_call.1} parent=1 // pred_check_branch
      %399 = sbr.rel (0) target = $region49
    $region48: #{tpu_custom_call.1} parent=1 // pred_region
      %400 = dma.done [#allocation4], 128
    $region49: #{tpu_custom_call.1} parent=1 // pred_fallthru
      _
    %401 = vsyncpa [#allocation3], 1
    %402 = vsyncpa [#allocation6], 1
    %403 = vsyncpa [#allocation9], 1
    %404 = vsyncpa [#allocation4], 1

</llo_original>
